<compile_context>
chip_gen: v5e
topology: v5e:2x2
jax: 0.10.0
libtpu: 0.0.40
codegen_flags: <defaults>
</compile_context>

<pallas_src>
import jax
import jax.numpy as jnp
from jax import lax
from jax.experimental import pallas as pl
from jax.experimental.pallas import tpu as pltpu

LN_EPS = 1e-5


def _layernorm_1pass(x, gamma, beta):
    """LayerNorm with single-pass statistics (E[x] and E[x^2] in one sweep)."""
    n = x.shape[-1]
    inv_n = 1.0 / n
    s1 = jnp.sum(x, axis=-1, keepdims=True)
    s2 = jnp.sum(x * x, axis=-1, keepdims=True)
    mu = s1 * inv_n
    var = jnp.maximum(s2 * inv_n - mu * mu, 0.0)
    return (x - mu) * lax.rsqrt(var + LN_EPS) * gamma + beta


def _make_kernel(mxu_dtype):
    def anchorconv_kernel(x_ref, g1_ref, b1_ref, wfused_ref, bfused_ref,
                          g2_ref, b2_ref, wrecv_ref, brecv_ref, o_ref):
        # x_ref: (tm, dim) tile of the flattened input.
        x = x_ref[...].astype(jnp.float32)

        # norm1 over `dim` (PyTorch code rebinds `input` to the normalized value,
        # so the residual below uses xn, NOT the raw input).
        xn = _layernorm_1pass(x, g1_ref[...], b1_ref[...])

        # fused (send Linear + anchor matmul): xn @ (W_send^T @ anchor^T) + b_fused
        r = jnp.dot(xn.astype(mxu_dtype), wfused_ref[...].astype(mxu_dtype),
                    preferred_element_type=jnp.float32) + bfused_ref[...]

        # norm2 over `n_anchor`
        rn = _layernorm_1pass(r, g2_ref[...], b2_ref[...])

        # recv: Linear(n_anchor -> dim)
        a = jnp.dot(rn.astype(mxu_dtype), wrecv_ref[...].astype(mxu_dtype),
                    preferred_element_type=jnp.float32) + brecv_ref[...]

        # sin + residual (residual is the normalized input)
        o_ref[...] = (xn + jnp.sin(a)).astype(o_ref.dtype)

    return anchorconv_kernel


def _round_up(x, m):
    return (x + m - 1) // m * m


def _pick_tm(M, dim, n_anchor, weight_bytes, tm_target=1024,
             vmem_budget=40 * 1024 * 1024):
    """Largest multiple-of-8 row tile that fits the VMEM budget and keeps grid>=2."""
    M8 = _round_up(max(M, 8), 8)
    tm = max(8, (min(tm_target, M8) // 8) * 8)
    # keep grid >= 2 so v7x's dual TensorCores can both be used
    if M8 // tm < 2 and M8 >= 16:
        tm = max(8, ((M8 // 2) // 8) * 8)

    def need(t):
        # double-buffered x + out tiles, intermediate (t, n_anchor), resident weights x2
        return 4 * t * dim * 4 + 2 * t * n_anchor * 4 + 2 * weight_bytes

    while tm > 8 and need(tm) > vmem_budget:
        tm = max(8, ((tm // 2) // 8) * 8)
    return tm, need(tm)


def anchorconv_forward(x, params, *, tm_target=1024, use_bf16_mxu=False):
    """x: (B, T, dim) or (M, dim) float32."""
    orig_shape = x.shape
    dim = orig_shape[-1]
    x2d = x.reshape(-1, dim)
    M = x2d.shape[0]

    (g1, b1, w_send, b_send, anchor_emb, g2, b2, w_recv, b_recv) = params
    n_anchor, dim_anchor = anchor_emb.shape

    # --- wrapper-side algebraic fusion (exact up to fp reassociation) ---------
    # send Linear followed immediately by anchor matmul has no nonlinearity in
    # between, so:  (xn @ Ws^T + bs) @ A^T  ==  xn @ (Ws^T @ A^T) + (bs @ A^T)
    wsend_t = w_send.T                                   # (dim, dim_anchor)
    anch_t = anchor_emb.T                                # (dim_anchor, n_anchor)
    w_fused = (wsend_t @ anch_t).astype(jnp.float32)     # (dim, n_anchor)
    b_fused = (b_send.reshape(1, dim_anchor) @ anch_t).astype(jnp.float32)  # (1, n_anchor)
    wrecv_t = w_recv.T.astype(jnp.float32)               # (n_anchor, dim)

    # 1-D params presented as (1, F) rows for clean lane-broadcasting.
    g1r, b1r = g1.reshape(1, dim), b1.reshape(1, dim)
    g2r, b2r = g2.reshape(1, n_anchor), b2.reshape(1, n_anchor)
    brecvr = b_recv.reshape(1, dim)

    weight_bytes = 4 * (w_fused.size + b_fused.size + wrecv_t.size + brecvr.size
                        + g1r.size + b1r.size + g2r.size + b2r.size)

    # --- tile sizing + row padding -------------------------------------------
    tm, vmem_needed = _pick_tm(M, dim, n_anchor, weight_bytes, tm_target=tm_target)
    M_pad = _round_up(M, tm)
    if M_pad != M:
        x2d = jnp.pad(x2d, ((0, M_pad - M), (0, 0)))
    grid = (M_pad // tm,)

    # only override the scoped-VMEM default when the tiles actually need it
    vmem_limit = None
    if vmem_needed > 24 * 1024 * 1024:
        vmem_limit = min(vmem_needed + (8 << 20), 64 << 20)

    cost = pl.CostEstimate(
        flops=4 * M_pad * dim * n_anchor,            # two matmuls per row
        transcendentals=M_pad * dim,                 # sin
        bytes_accessed=2 * M_pad * dim * 4 + weight_bytes,
    )

    def full(shape):
        return pl.BlockSpec(shape, lambda i: (0, 0))

    compiler_kwargs = dict(dimension_semantics=("parallel",))
    if vmem_limit is not None:
        compiler_kwargs["vmem_limit_bytes"] = int(vmem_limit)

    mxu_dtype = jnp.bfloat16 if use_bf16_mxu else jnp.float32
    kernel = _make_kernel(mxu_dtype)

    out = pl.pallas_call(
        kernel,
        out_shape=jax.ShapeDtypeStruct((M_pad, dim), x2d.dtype),
        grid=grid,
        in_specs=[
            pl.BlockSpec((tm, dim), lambda i: (i, 0)),   # x tile
            full((1, dim)), full((1, dim)),              # norm1 gamma/beta
            full((dim, n_anchor)), full((1, n_anchor)),  # fused send+anchor W, b
            full((1, n_anchor)), full((1, n_anchor)),    # norm2 gamma/beta
            full((n_anchor, dim)), full((1, dim)),       # recv W^T, b
        ],
        out_specs=pl.BlockSpec((tm, dim), lambda i: (i, 0)),
        compiler_params=pltpu.CompilerParams(**compiler_kwargs),
        cost_estimate=cost,
    )(x2d, g1r, b1r, w_fused, b_fused, g2r, b2r, wrecv_t, brecvr)

    return out[:M].reshape(orig_shape)


def make_params(key, dim, n_anchor, dim_anchor):
    """Deterministic synthetic parameters mirroring the module's __init__ shapes."""
    k_anchor, k_send, k_recv = jax.random.split(key, 3)

    def xavier(k, fan_out, fan_in):
        a = jnp.sqrt(6.0 / (fan_in + fan_out))
        return jax.random.uniform(k, (fan_out, fan_in), jnp.float32, -a, a)

    anchor_emb = xavier(k_anchor, n_anchor, dim_anchor)   # (n_anchor, dim_anchor)
    w_send = xavier(k_send, dim_anchor, dim)              # Linear(dim -> dim_anchor).weight
    b_send = jnp.zeros((dim_anchor,), jnp.float32)
    w_recv = xavier(k_recv, dim, n_anchor)                # Linear(n_anchor -> dim).weight
    b_recv = jnp.zeros((dim,), jnp.float32)
    g1 = jnp.ones((dim,), jnp.float32)
    b1 = jnp.zeros((dim,), jnp.float32)
    g2 = jnp.ones((n_anchor,), jnp.float32)
    b2 = jnp.zeros((n_anchor,), jnp.float32)
    return (g1, b1, w_send, b_send, anchor_emb, g2, b2, w_recv, b_recv)


def reference_forward(x, params):
    """Pure-JAX reference reproducing the PyTorch forward semantics (unfused)."""
    (g1, b1, w_send, b_send, anchor_emb, g2, b2, w_recv, b_recv) = params

    def ln(v, g, b):
        mu = jnp.mean(v, axis=-1, keepdims=True)
        var = jnp.mean((v - mu) ** 2, axis=-1, keepdims=True)
        return (v - mu) / jnp.sqrt(var + LN_EPS) * g + b

    xn = ln(x, g1, b1)
    s = xn @ w_send.T + b_send
    r = s @ anchor_emb.T
    rn = ln(r, g2, b2)
    a = rn @ w_recv.T + b_recv
    return xn + jnp.sin(a)


if __name__ == "__main__":
    B, T, dim = 2, 8, 32
    n_anchor, dim_anchor = 16, 8

    key = jax.random.PRNGKey(0)
    k_x, k_p = jax.random.split(key)
    x = jax.random.normal(k_x, (B, T, dim), jnp.float32)
    params = make_params(k_p, dim, n_anchor, dim_anchor)

    out = anchorconv_forward(x, params)
    out = jax.block_until_ready(out)

    ref = reference_forward(x, params)
    assert out.shape == x.shape
    # fused send+anchor matmul and single-pass LN stats introduce fp reassociation;
    # keep a slightly relaxed-but-tight tolerance.
    assert jnp.allclose(out, ref, atol=1e-4, rtol=1e-5), "mismatch vs reference"

    print("KERNEL_OK")
</pallas_src>

<mosaic_0001>
module attributes {stable_mosaic.version = 11 : i64} {
  func.func @anchorconv_kernel(%arg0: i32, %arg1: memref<8x32xf32, #tpu.memory_space<vmem>>, %arg2: memref<1x32xf32, #tpu.memory_space<vmem>>, %arg3: memref<1x32xf32, #tpu.memory_space<vmem>>, %arg4: memref<32x16xf32, #tpu.memory_space<vmem>>, %arg5: memref<1x16xf32, #tpu.memory_space<vmem>>, %arg6: memref<1x16xf32, #tpu.memory_space<vmem>>, %arg7: memref<1x16xf32, #tpu.memory_space<vmem>>, %arg8: memref<16x32xf32, #tpu.memory_space<vmem>>, %arg9: memref<1x32xf32, #tpu.memory_space<vmem>>, %arg10: memref<8x32xf32, #tpu.memory_space<vmem>>) attributes {dimension_semantics = [#tpu.dimension_semantics<parallel>], iteration_bounds = array<i64: 2>, scalar_prefetch = 0 : i64, scratch_operands = 0 : i64, tpu.core_type = #tpu.core_type<tc>, window_params = [{transform_indices = @transform_0, window_bounds = array<i64: 8, 32>}, {pipeline_mode = #tpu.pipeline_mode<synchronous>, transform_indices = @transform_1, window_bounds = array<i64: 1, 32>}, {pipeline_mode = #tpu.pipeline_mode<synchronous>, transform_indices = @transform_2, window_bounds = array<i64: 1, 32>}, {pipeline_mode = #tpu.pipeline_mode<synchronous>, transform_indices = @transform_3, window_bounds = array<i64: 32, 16>}, {pipeline_mode = #tpu.pipeline_mode<synchronous>, transform_indices = @transform_4, window_bounds = array<i64: 1, 16>}, {pipeline_mode = #tpu.pipeline_mode<synchronous>, transform_indices = @transform_5, window_bounds = array<i64: 1, 16>}, {pipeline_mode = #tpu.pipeline_mode<synchronous>, transform_indices = @transform_6, window_bounds = array<i64: 1, 16>}, {pipeline_mode = #tpu.pipeline_mode<synchronous>, transform_indices = @transform_7, window_bounds = array<i64: 16, 32>}, {pipeline_mode = #tpu.pipeline_mode<synchronous>, transform_indices = @transform_8, window_bounds = array<i64: 1, 32>}, {transform_indices = @transform_9, window_bounds = array<i64: 8, 32>}]} {
    %c0 = arith.constant 0 : index
    %c0_0 = arith.constant 0 : index
    %0 = vector.load %arg1[%c0, %c0_0] : memref<8x32xf32, #tpu.memory_space<vmem>>, vector<8x32xf32>
    %c0_1 = arith.constant 0 : index
    %c0_2 = arith.constant 0 : index
    %1 = vector.load %arg2[%c0_1, %c0_2] : memref<1x32xf32, #tpu.memory_space<vmem>>, vector<1x32xf32>
    %c0_3 = arith.constant 0 : index
    %c0_4 = arith.constant 0 : index
    %2 = vector.load %arg3[%c0_3, %c0_4] : memref<1x32xf32, #tpu.memory_space<vmem>>, vector<1x32xf32>
    %cst = arith.constant dense<0.000000e+00> : vector<8xf32>
    %3 = vector.multi_reduction <add>, %0, %cst [1] : vector<8x32xf32> to vector<8xf32>
    %4 = vector.shape_cast %3 : vector<8xf32> to vector<8x1xf32>
    %5 = arith.mulf %0, %0 : vector<8x32xf32>
    %cst_5 = arith.constant dense<0.000000e+00> : vector<8xf32>
    %6 = vector.multi_reduction <add>, %5, %cst_5 [1] : vector<8x32xf32> to vector<8xf32>
    %7 = vector.shape_cast %6 : vector<8xf32> to vector<8x1xf32>
    %cst_6 = arith.constant 3.125000e-02 : f32
    %8 = vector.broadcast %cst_6 : f32 to vector<8x1xf32>
    %9 = arith.mulf %4, %8 : vector<8x1xf32>
    %cst_7 = arith.constant 3.125000e-02 : f32
    %10 = vector.broadcast %cst_7 : f32 to vector<8x1xf32>
    %11 = arith.mulf %7, %10 : vector<8x1xf32>
    %12 = arith.mulf %9, %9 : vector<8x1xf32>
    %13 = arith.subf %11, %12 : vector<8x1xf32>
    %cst_8 = arith.constant 0.000000e+00 : f32
    %14 = vector.broadcast %cst_8 : f32 to vector<8x1xf32>
    %15 = arith.maximumf %13, %14 : vector<8x1xf32>
    %16 = vector.broadcast %9 : vector<8x1xf32> to vector<8x32xf32>
    %17 = arith.subf %0, %16 : vector<8x32xf32>
    %cst_9 = arith.constant 9.99999974E-6 : f32
    %18 = vector.broadcast %cst_9 : f32 to vector<8x1xf32>
    %19 = arith.addf %15, %18 : vector<8x1xf32>
    %20 = math.rsqrt %19 : vector<8x1xf32>
    %21 = vector.broadcast %20 : vector<8x1xf32> to vector<8x32xf32>
    %22 = arith.mulf %17, %21 : vector<8x32xf32>
    %23 = vector.broadcast %1 : vector<1x32xf32> to vector<8x32xf32>
    %24 = arith.mulf %22, %23 : vector<8x32xf32>
    %25 = vector.broadcast %2 : vector<1x32xf32> to vector<8x32xf32>
    %26 = arith.addf %24, %25 : vector<8x32xf32>
    %c0_10 = arith.constant 0 : index
    %c0_11 = arith.constant 0 : index
    %27 = vector.load %arg4[%c0_10, %c0_11] : memref<32x16xf32, #tpu.memory_space<vmem>>, vector<32x16xf32>
    %cst_12 = arith.constant dense<0.000000e+00> : vector<8x16xf32>
    %28 = tpu.matmul %26, %27, %cst_12 {dimension_numbers = #tpu.dot_dimension_numbers<[1], [0], [0], [1], [0, 0, 1, 1], [], []>} : vector<8x32xf32>, vector<32x16xf32>, vector<8x16xf32> -> vector<8x16xf32>
    %c0_13 = arith.constant 0 : index
    %c0_14 = arith.constant 0 : index
    %29 = vector.load %arg5[%c0_13, %c0_14] : memref<1x16xf32, #tpu.memory_space<vmem>>, vector<1x16xf32>
    %30 = vector.broadcast %29 : vector<1x16xf32> to vector<8x16xf32>
    %31 = arith.addf %28, %30 : vector<8x16xf32>
    %c0_15 = arith.constant 0 : index
    %c0_16 = arith.constant 0 : index
    %32 = vector.load %arg6[%c0_15, %c0_16] : memref<1x16xf32, #tpu.memory_space<vmem>>, vector<1x16xf32>
    %c0_17 = arith.constant 0 : index
    %c0_18 = arith.constant 0 : index
    %33 = vector.load %arg7[%c0_17, %c0_18] : memref<1x16xf32, #tpu.memory_space<vmem>>, vector<1x16xf32>
    %cst_19 = arith.constant dense<0.000000e+00> : vector<8xf32>
    %34 = vector.multi_reduction <add>, %31, %cst_19 [1] : vector<8x16xf32> to vector<8xf32>
    %35 = vector.shape_cast %34 : vector<8xf32> to vector<8x1xf32>
    %36 = arith.mulf %31, %31 : vector<8x16xf32>
    %cst_20 = arith.constant dense<0.000000e+00> : vector<8xf32>
    %37 = vector.multi_reduction <add>, %36, %cst_20 [1] : vector<8x16xf32> to vector<8xf32>
    %38 = vector.shape_cast %37 : vector<8xf32> to vector<8x1xf32>
    %cst_21 = arith.constant 6.250000e-02 : f32
    %39 = vector.broadcast %cst_21 : f32 to vector<8x1xf32>
    %40 = arith.mulf %35, %39 : vector<8x1xf32>
    %cst_22 = arith.constant 6.250000e-02 : f32
    %41 = vector.broadcast %cst_22 : f32 to vector<8x1xf32>
    %42 = arith.mulf %38, %41 : vector<8x1xf32>
    %43 = arith.mulf %40, %40 : vector<8x1xf32>
    %44 = arith.subf %42, %43 : vector<8x1xf32>
    %cst_23 = arith.constant 0.000000e+00 : f32
    %45 = vector.broadcast %cst_23 : f32 to vector<8x1xf32>
    %46 = arith.maximumf %44, %45 : vector<8x1xf32>
    %47 = vector.broadcast %40 : vector<8x1xf32> to vector<8x16xf32>
    %48 = arith.subf %31, %47 : vector<8x16xf32>
    %cst_24 = arith.constant 9.99999974E-6 : f32
    %49 = vector.broadcast %cst_24 : f32 to vector<8x1xf32>
    %50 = arith.addf %46, %49 : vector<8x1xf32>
    %51 = math.rsqrt %50 : vector<8x1xf32>
    %52 = vector.broadcast %51 : vector<8x1xf32> to vector<8x16xf32>
    %53 = arith.mulf %48, %52 : vector<8x16xf32>
    %54 = vector.broadcast %32 : vector<1x16xf32> to vector<8x16xf32>
    %55 = arith.mulf %53, %54 : vector<8x16xf32>
    %56 = vector.broadcast %33 : vector<1x16xf32> to vector<8x16xf32>
    %57 = arith.addf %55, %56 : vector<8x16xf32>
    %c0_25 = arith.constant 0 : index
    %c0_26 = arith.constant 0 : index
    %58 = vector.load %arg8[%c0_25, %c0_26] : memref<16x32xf32, #tpu.memory_space<vmem>>, vector<16x32xf32>
    %cst_27 = arith.constant dense<0.000000e+00> : vector<8x32xf32>
    %59 = tpu.matmul %57, %58, %cst_27 {dimension_numbers = #tpu.dot_dimension_numbers<[1], [0], [0], [1], [0, 0, 1, 1], [], []>} : vector<8x16xf32>, vector<16x32xf32>, vector<8x32xf32> -> vector<8x32xf32>
    %c0_28 = arith.constant 0 : index
    %c0_29 = arith.constant 0 : index
    %60 = vector.load %arg9[%c0_28, %c0_29] : memref<1x32xf32, #tpu.memory_space<vmem>>, vector<1x32xf32>
    %61 = vector.broadcast %60 : vector<1x32xf32> to vector<8x32xf32>
    %62 = arith.addf %59, %61 : vector<8x32xf32>
    %63 = math.sin %62 : vector<8x32xf32>
    %64 = arith.addf %26, %63 : vector<8x32xf32>
    %c0_30 = arith.constant 0 : index
    %c0_31 = arith.constant 0 : index
    %65 = vector.load %arg10[%c0_30, %c0_31] : memref<8x32xf32, #tpu.memory_space<vmem>>, vector<8x32xf32>
    tpu.vector_store %arg10[%c0_30, %c0_31], %64 {strides = array<i32>} : memref<8x32xf32, #tpu.memory_space<vmem>>, vector<8x32xf32>,
    return
  }
  func.func @transform_0(%arg0: i32) -> (i32, i32) {
    %c0_i32 = arith.constant 0 : i32
    %c0_i32_0 = arith.constant 0 : i32
    return %arg0, %c0_i32 : i32, i32
  }
  func.func @transform_1(%arg0: i32) -> (i32, i32) {
    %c0_i32 = arith.constant 0 : i32
    %c0_i32_0 = arith.constant 0 : i32
    %c0_i32_1 = arith.constant 0 : i32
    return %c0_i32, %c0_i32_0 : i32, i32
  }
  func.func @transform_2(%arg0: i32) -> (i32, i32) {
    %c0_i32 = arith.constant 0 : i32
    %c0_i32_0 = arith.constant 0 : i32
    %c0_i32_1 = arith.constant 0 : i32
    return %c0_i32, %c0_i32_0 : i32, i32
  }
  func.func @transform_3(%arg0: i32) -> (i32, i32) {
    %c0_i32 = arith.constant 0 : i32
    %c0_i32_0 = arith.constant 0 : i32
    %c0_i32_1 = arith.constant 0 : i32
    return %c0_i32, %c0_i32_0 : i32, i32
  }
  func.func @transform_4(%arg0: i32) -> (i32, i32) {
    %c0_i32 = arith.constant 0 : i32
    %c0_i32_0 = arith.constant 0 : i32
    %c0_i32_1 = arith.constant 0 : i32
    return %c0_i32, %c0_i32_0 : i32, i32
  }
  func.func @transform_5(%arg0: i32) -> (i32, i32) {
    %c0_i32 = arith.constant 0 : i32
    %c0_i32_0 = arith.constant 0 : i32
    %c0_i32_1 = arith.constant 0 : i32
    return %c0_i32, %c0_i32_0 : i32, i32
  }
  func.func @transform_6(%arg0: i32) -> (i32, i32) {
    %c0_i32 = arith.constant 0 : i32
    %c0_i32_0 = arith.constant 0 : i32
    %c0_i32_1 = arith.constant 0 : i32
    return %c0_i32, %c0_i32_0 : i32, i32
  }
  func.func @transform_7(%arg0: i32) -> (i32, i32) {
    %c0_i32 = arith.constant 0 : i32
    %c0_i32_0 = arith.constant 0 : i32
    %c0_i32_1 = arith.constant 0 : i32
    return %c0_i32, %c0_i32_0 : i32, i32
  }
  func.func @transform_8(%arg0: i32) -> (i32, i32) {
    %c0_i32 = arith.constant 0 : i32
    %c0_i32_0 = arith.constant 0 : i32
    %c0_i32_1 = arith.constant 0 : i32
    return %c0_i32, %c0_i32_0 : i32, i32
  }
  func.func @transform_9(%arg0: i32) -> (i32, i32) {
    %c0_i32 = arith.constant 0 : i32
    %c0_i32_0 = arith.constant 0 : i32
    return %arg0, %c0_i32 : i32, i32
  }
}

</mosaic_0001>

<llo_original>
// kernel: tpu_custom_call.1
$region0: #{tpu_custom_call.1}
  #allocation0 [shape = 'u32[]', space=smem, size = 0x4, offset = 0x4, fixed_abs, tag = 'smem constant byte address 0x4 - core index']
  #allocation1 [shape = 'u32[72,128]{1,0:T(1,128)}', space=vmem, size = 0x9000, scoped, tag = 'internal scratch']
  %s0 = inlined_call_operand.vmem [shape: f32[16,32], index: 0, kind: input, shape index: {}]
  %s1 = inlined_call_operand.vmem [shape: f32[1,32], index: 1, kind: input, shape index: {}]
  %s2 = inlined_call_operand.vmem [shape: f32[1,32], index: 2, kind: input, shape index: {}]
  %s3 = inlined_call_operand.vmem [shape: f32[32,16], index: 3, kind: input, shape index: {}]
  %s4 = inlined_call_operand.vmem [shape: f32[1,16], index: 4, kind: input, shape index: {}]
  %s5 = inlined_call_operand.vmem [shape: f32[1,16], index: 5, kind: input, shape index: {}]
  %s6 = inlined_call_operand.vmem [shape: f32[1,16], index: 6, kind: input, shape index: {}]
  %s7 = inlined_call_operand.vmem [shape: f32[16,32], index: 7, kind: input, shape index: {}]
  %s8 = inlined_call_operand.vmem [shape: f32[1,32], index: 8, kind: input, shape index: {}]
  %s9 = inlined_call_operand.hbm [shape: f32[16,32], index: 9, kind: output, shape index: {}]
  %s10 = sld [smem:[#allocation0]]
  $region69: #{tpu_custom_call.1} parent=0
    _
  %s12 = ssub.s32 1, %s10
  %s13 = scalar_select 0, %s12, %s10
  $region1: #{tpu_custom_call.1} parent=0
    #allocation2 [shape = 'u8[8192]{0}', space=vmem, size = 0x2000, scoped, tag = 'output window, operand 0']
    #allocation3 [shape = 's32[2]{0}', space=sflag, size = 0x8, scoped, tag = 'scoped memory for tpu_custom_call.1']
    %14 = vsyncpa [#allocation3], 0
    %s15 = scalar_lea.sflag [#allocation3], 1
    %16 = vsyncpa %s15, 0
    loop: start=0, step=1, limit=4
    $region2: #{tpu_custom_call.1} parent=1 // loop_pre_header
      _
    $region3: #{tpu_custom_call.1} parent=1 // loop_header
      %s18 = sphi 0, %s22
      %p19 = scmp.ge.s32.totalorder %s18, 4
      %s28 = sphi 0, %s30
      %s31 = sphi 0, %s28
      %s32 = sphi 0, %s31
      %s48 = sphi 0, %s32
      %s52 = sphi 0, %s52
      %s54 = sphi 0, %s52
      %s55 = sphi 0, %s54
      %s69 = sphi 0, %s55
      %s73 = sphi 0, %s73
      %s75 = sphi 0, %s73
      %s76 = sphi 0, %s75
      %s90 = sphi 0, %s76
      %s94 = sphi 0, %s94
      %s96 = sphi 0, %s94
      %s97 = sphi 0, %s96
      %s111 = sphi 0, %s97
      %s115 = sphi 0, %s115
      %s117 = sphi 0, %s115
      %s118 = sphi 0, %s117
      %s132 = sphi 0, %s118
      %s136 = sphi 0, %s136
      %s138 = sphi 0, %s136
      %s139 = sphi 0, %s138
      %s153 = sphi 0, %s139
      %s157 = sphi 0, %s157
      %s159 = sphi 0, %s157
      %s160 = sphi 0, %s159
      %s174 = sphi 0, %s160
      %s178 = sphi 0, %s178
      %s180 = sphi 0, %s178
      %s181 = sphi 0, %s180
      %s195 = sphi 0, %s181
      %s199 = sphi 0, %s199
      %s201 = sphi 0, %s199
      %s202 = sphi 0, %s201
      %s216 = sphi 0, %s202
      %s222 = sphi 0, %s224
      %s225 = sphi 0, %s222
      %s226 = sphi 0, %s225
      %s242 = sphi 0, %s226
    $region4: #{tpu_custom_call.1} parent=1 // loop_header_branch
      %21 = sbr.rel (%p19) target = $region8
    $region5: #{tpu_custom_call.1} parent=1 // loop_body
      %s23 = ssub.s32 %s18, 1
      %s24 = ssub.s32 %s18, 2
      %s25 = sadd.s32 %s18, 1
      %s26 = ssub.s32 %s18, %s25
      %p27 = scmp.eq.s32.totalorder %s26, 0
      %s29 = sadd.s32 %s28, 1
      %s30 = scalar_select %p27, %s28, %s29
      %p33 = pneg %p27
      %p34 = scmp.eq.s32.totalorder %s18, 1
      %p35 = por %p33, %p34
      %p36 = scmp.ne.s32.totalorder %s28, %s31
      %p37 = scmp.eq.s32.totalorder %s18, 0
      %p38 = por %p36, %p37
      %p39 = scmp.ne.s32.totalorder %s28, %s31
      %p40 = scmp.eq.s32.totalorder %s23, 1
      %p41 = por %p39, %p40
      %p42 = scmp.ne.s32.totalorder %s31, %s32
      %p43 = scmp.eq.s32.totalorder %s23, 0
      %p44 = por %p42, %p43
      %p45 = scmp.ne.s32.totalorder %s31, %s32
      %p46 = scmp.eq.s32.totalorder %s24, 1
      %p47 = por %p45, %p46
      %p49 = scmp.ne.s32.totalorder %s32, %s48
      %p50 = scmp.eq.s32.totalorder %s24, 0
      %p51 = por %p49, %p50
      %s53 = sadd.s32 %s52, 1
      %p56 = scmp.eq.s32.totalorder %s18, 1
      %p57 = scmp.ne.s32.totalorder %s52, %s54
      %p58 = scmp.eq.s32.totalorder %s18, 0
      %p59 = por %p57, %p58
      %p60 = scmp.ne.s32.totalorder %s52, %s54
      %p61 = scmp.eq.s32.totalorder %s23, 1
      %p62 = por %p60, %p61
      %p63 = scmp.ne.s32.totalorder %s54, %s55
      %p64 = scmp.eq.s32.totalorder %s23, 0
      %p65 = por %p63, %p64
      %p66 = scmp.ne.s32.totalorder %s54, %s55
      %p67 = scmp.eq.s32.totalorder %s24, 1
      %p68 = por %p66, %p67
      %p70 = scmp.ne.s32.totalorder %s55, %s69
      %p71 = scmp.eq.s32.totalorder %s24, 0
      %p72 = por %p70, %p71
      %s74 = sadd.s32 %s73, 1
      %p77 = scmp.eq.s32.totalorder %s18, 1
      %p78 = scmp.ne.s32.totalorder %s73, %s75
      %p79 = scmp.eq.s32.totalorder %s18, 0
      %p80 = por %p78, %p79
      %p81 = scmp.ne.s32.totalorder %s73, %s75
      %p82 = scmp.eq.s32.totalorder %s23, 1
      %p83 = por %p81, %p82
      %p84 = scmp.ne.s32.totalorder %s75, %s76
      %p85 = scmp.eq.s32.totalorder %s23, 0
      %p86 = por %p84, %p85
      %p87 = scmp.ne.s32.totalorder %s75, %s76
      %p88 = scmp.eq.s32.totalorder %s24, 1
      %p89 = por %p87, %p88
      %p91 = scmp.ne.s32.totalorder %s76, %s90
      %p92 = scmp.eq.s32.totalorder %s24, 0
      %p93 = por %p91, %p92
      %s95 = sadd.s32 %s94, 1
      %p98 = scmp.eq.s32.totalorder %s18, 1
      %p99 = scmp.ne.s32.totalorder %s94, %s96
      %p100 = scmp.eq.s32.totalorder %s18, 0
      %p101 = por %p99, %p100
      %p102 = scmp.ne.s32.totalorder %s94, %s96
      %p103 = scmp.eq.s32.totalorder %s23, 1
      %p104 = por %p102, %p103
      %p105 = scmp.ne.s32.totalorder %s96, %s97
      %p106 = scmp.eq.s32.totalorder %s23, 0
      %p107 = por %p105, %p106
      %p108 = scmp.ne.s32.totalorder %s96, %s97
      %p109 = scmp.eq.s32.totalorder %s24, 1
      %p110 = por %p108, %p109
      %p112 = scmp.ne.s32.totalorder %s97, %s111
      %p113 = scmp.eq.s32.totalorder %s24, 0
      %p114 = por %p112, %p113
      %s116 = sadd.s32 %s115, 1
      %p119 = scmp.eq.s32.totalorder %s18, 1
      %p120 = scmp.ne.s32.totalorder %s115, %s117
      %p121 = scmp.eq.s32.totalorder %s18, 0
      %p122 = por %p120, %p121
      %p123 = scmp.ne.s32.totalorder %s115, %s117
      %p124 = scmp.eq.s32.totalorder %s23, 1
      %p125 = por %p123, %p124
      %p126 = scmp.ne.s32.totalorder %s117, %s118
      %p127 = scmp.eq.s32.totalorder %s23, 0
      %p128 = por %p126, %p127
      %p129 = scmp.ne.s32.totalorder %s117, %s118
      %p130 = scmp.eq.s32.totalorder %s24, 1
      %p131 = por %p129, %p130
      %p133 = scmp.ne.s32.totalorder %s118, %s132
      %p134 = scmp.eq.s32.totalorder %s24, 0
      %p135 = por %p133, %p134
      %s137 = sadd.s32 %s136, 1
      %p140 = scmp.eq.s32.totalorder %s18, 1
      %p141 = scmp.ne.s32.totalorder %s136, %s138
      %p142 = scmp.eq.s32.totalorder %s18, 0
      %p143 = por %p141, %p142
      %p144 = scmp.ne.s32.totalorder %s136, %s138
      %p145 = scmp.eq.s32.totalorder %s23, 1
      %p146 = por %p144, %p145
      %p147 = scmp.ne.s32.totalorder %s138, %s139
      %p148 = scmp.eq.s32.totalorder %s23, 0
      %p149 = por %p147, %p148
      %p150 = scmp.ne.s32.totalorder %s138, %s139
      %p151 = scmp.eq.s32.totalorder %s24, 1
      %p152 = por %p150, %p151
      %p154 = scmp.ne.s32.totalorder %s139, %s153
      %p155 = scmp.eq.s32.totalorder %s24, 0
      %p156 = por %p154, %p155
      %s158 = sadd.s32 %s157, 1
      %p161 = scmp.eq.s32.totalorder %s18, 1
      %p162 = scmp.ne.s32.totalorder %s157, %s159
      %p163 = scmp.eq.s32.totalorder %s18, 0
      %p164 = por %p162, %p163
      %p165 = scmp.ne.s32.totalorder %s157, %s159
      %p166 = scmp.eq.s32.totalorder %s23, 1
      %p167 = por %p165, %p166
      %p168 = scmp.ne.s32.totalorder %s159, %s160
      %p169 = scmp.eq.s32.totalorder %s23, 0
      %p170 = por %p168, %p169
      %p171 = scmp.ne.s32.totalorder %s159, %s160
      %p172 = scmp.eq.s32.totalorder %s24, 1
      %p173 = por %p171, %p172
      %p175 = scmp.ne.s32.totalorder %s160, %s174
      %p176 = scmp.eq.s32.totalorder %s24, 0
      %p177 = por %p175, %p176
      %s179 = sadd.s32 %s178, 1
      %p182 = scmp.eq.s32.totalorder %s18, 1
      %p183 = scmp.ne.s32.totalorder %s178, %s180
      %p184 = scmp.eq.s32.totalorder %s18, 0
      %p185 = por %p183, %p184
      %p186 = scmp.ne.s32.totalorder %s178, %s180
      %p187 = scmp.eq.s32.totalorder %s23, 1
      %p188 = por %p186, %p187
      %p189 = scmp.ne.s32.totalorder %s180, %s181
      %p190 = scmp.eq.s32.totalorder %s23, 0
      %p191 = por %p189, %p190
      %p192 = scmp.ne.s32.totalorder %s180, %s181
      %p193 = scmp.eq.s32.totalorder %s24, 1
      %p194 = por %p192, %p193
      %p196 = scmp.ne.s32.totalorder %s181, %s195
      %p197 = scmp.eq.s32.totalorder %s24, 0
      %p198 = por %p196, %p197
      %s200 = sadd.s32 %s199, 1
      %p203 = scmp.eq.s32.totalorder %s18, 1
      %p204 = scmp.ne.s32.totalorder %s199, %s201
      %p205 = scmp.eq.s32.totalorder %s18, 0
      %p206 = por %p204, %p205
      %p207 = scmp.ne.s32.totalorder %s199, %s201
      %p208 = scmp.eq.s32.totalorder %s23, 1
      %p209 = por %p207, %p208
      %p210 = scmp.ne.s32.totalorder %s201, %s202
      %p211 = scmp.eq.s32.totalorder %s23, 0
      %p212 = por %p210, %p211
      %p213 = scmp.ne.s32.totalorder %s201, %s202
      %p214 = scmp.eq.s32.totalorder %s24, 1
      %p215 = por %p213, %p214
      %p217 = scmp.ne.s32.totalorder %s202, %s216
      %p218 = scmp.eq.s32.totalorder %s24, 0
      %p219 = por %p217, %p218
      %s220 = ssub.s32 %s18, %s25
      %p221 = scmp.eq.s32.totalorder %s220, 0
      %s223 = sadd.s32 %s222, 1
      %s224 = scalar_select %p221, %s222, %s223
      %p227 = pneg %p221
      %p228 = scmp.eq.s32.totalorder %s18, 1
      %p229 = por %p227, %p228
      %p230 = scmp.ne.s32.totalorder %s222, %s225
      %p231 = scmp.eq.s32.totalorder %s18, 0
      %p232 = por %p230, %p231
      %p233 = scmp.ne.s32.totalorder %s222, %s225
      %p234 = scmp.eq.s32.totalorder %s23, 1
      %p235 = por %p233, %p234
      %p236 = scmp.ne.s32.totalorder %s225, %s226
      %p237 = scmp.eq.s32.totalorder %s23, 0
      %p238 = por %p236, %p237
      %p239 = scmp.ne.s32.totalorder %s225, %s226
      %p240 = scmp.eq.s32.totalorder %s24, 1
      %p241 = por %p239, %p240
      %p243 = scmp.ne.s32.totalorder %s226, %s242
      %p244 = scmp.eq.s32.totalorder %s24, 0
      %p245 = por %p243, %p244
      %p246 = scmp.le.s32.totalorder 1, %s18
      %p247 = scmp.lt.s32.totalorder %s18, 3
      %p248 = pnand %p246, %p247
      %p249 = pneg %p248
      // Predicated region
      $region9: #{tpu_custom_call.1} parent=5 // pred_check
        _
      $region10: #{tpu_custom_call.1} parent=5 // pred_check_branch
        %251 = sbr.rel (%p248) target = $region12
      $region11: #{tpu_custom_call.1} parent=5 // pred_region
        %s252 = ssub.s32 %s18, 1
        // Predicated region
        $region13: #{tpu_custom_call.1} parent=11 // pred_check
          %p253 = pneg %p65
        $region14: #{tpu_custom_call.1} parent=11 // pred_check_branch
          %255 = sbr.rel (%p253) target = $region16
        $region15: #{tpu_custom_call.1} parent=11 // pred_region
          _
        $region16: #{tpu_custom_call.1} parent=11 // pred_fallthru
          _
        // Predicated region
        $region17: #{tpu_custom_call.1} parent=11 // pred_check
          %p256 = pneg %p86
        $region18: #{tpu_custom_call.1} parent=11 // pred_check_branch
          %258 = sbr.rel (%p256) target = $region20
        $region19: #{tpu_custom_call.1} parent=11 // pred_region
          _
        $region20: #{tpu_custom_call.1} parent=11 // pred_fallthru
          _
        // Predicated region
        $region21: #{tpu_custom_call.1} parent=11 // pred_check
          %p259 = pneg %p107
        $region22: #{tpu_custom_call.1} parent=11 // pred_check_branch
          %261 = sbr.rel (%p259) target = $region24
        $region23: #{tpu_custom_call.1} parent=11 // pred_region
          _
        $region24: #{tpu_custom_call.1} parent=11 // pred_fallthru
          _
        // Predicated region
        $region25: #{tpu_custom_call.1} parent=11 // pred_check
          %p262 = pneg %p128
        $region26: #{tpu_custom_call.1} parent=11 // pred_check_branch
          %264 = sbr.rel (%p262) target = $region28
        $region27: #{tpu_custom_call.1} parent=11 // pred_region
          _
        $region28: #{tpu_custom_call.1} parent=11 // pred_fallthru
          _
        // Predicated region
        $region29: #{tpu_custom_call.1} parent=11 // pred_check
          %p265 = pneg %p149
        $region30: #{tpu_custom_call.1} parent=11 // pred_check_branch
          %267 = sbr.rel (%p265) target = $region32
        $region31: #{tpu_custom_call.1} parent=11 // pred_region
          _
        $region32: #{tpu_custom_call.1} parent=11 // pred_fallthru
          _
        // Predicated region
        $region33: #{tpu_custom_call.1} parent=11 // pred_check
          %p268 = pneg %p170
        $region34: #{tpu_custom_call.1} parent=11 // pred_check_branch
          %270 = sbr.rel (%p268) target = $region36
        $region35: #{tpu_custom_call.1} parent=11 // pred_region
          _
        $region36: #{tpu_custom_call.1} parent=11 // pred_fallthru
          _
        // Predicated region
        $region37: #{tpu_custom_call.1} parent=11 // pred_check
          %p271 = pneg %p191
        $region38: #{tpu_custom_call.1} parent=11 // pred_check_branch
          %273 = sbr.rel (%p271) target = $region40
        $region39: #{tpu_custom_call.1} parent=11 // pred_region
          _
        $region40: #{tpu_custom_call.1} parent=11 // pred_fallthru
          _
        // Predicated region
        $region41: #{tpu_custom_call.1} parent=11 // pred_check
          %p274 = pneg %p212
        $region42: #{tpu_custom_call.1} parent=11 // pred_check_branch
          %276 = sbr.rel (%p274) target = $region44
        $region43: #{tpu_custom_call.1} parent=11 // pred_region
          _
        $region44: #{tpu_custom_call.1} parent=11 // pred_fallthru
          _
      $region12: #{tpu_custom_call.1} parent=5 // pred_fallthru
        _
      %p277 = scmp.lt.s32.totalorder %s18, 2
      // Predicated region
      $region45: #{tpu_custom_call.1} parent=5 // pred_check
        %p278 = pneg %p277
      $region46: #{tpu_custom_call.1} parent=5 // pred_check_branch
        %280 = sbr.rel (%p278) target = $region48
      $region47: #{tpu_custom_call.1} parent=5 // pred_region
        // Predicated region
        $region49: #{tpu_custom_call.1} parent=47 // pred_check
          %p281 = pneg %p38
        $region50: #{tpu_custom_call.1} parent=47 // pred_check_branch
          %283 = sbr.rel (%p281) target = $region52
        $region51: #{tpu_custom_call.1} parent=47 // pred_region
          %p284 = scmp.lt.s32.totalorder %s18, 1
          %s285 = scalar_select %p284, %s18, 1
          %s286 = smul.addr %s285, 8
          %s287 = scalar_lea.vmem %s0, %s286
        $region52: #{tpu_custom_call.1} parent=47 // pred_fallthru
          _
      $region48: #{tpu_custom_call.1} parent=5 // pred_fallthru
        _
      %p288 = scmp.le.s32.totalorder 1, %s18
      %p289 = scmp.lt.s32.totalorder %s18, 3
      %p290 = pnand %p288, %p289
      %p291 = pneg %p290
      // Predicated region
      $region53: #{tpu_custom_call.1} parent=5 // pred_check
        _
      $region54: #{tpu_custom_call.1} parent=5 // pred_check_branch
        %293 = sbr.rel (%p290) target = $region56
      $region55: #{tpu_custom_call.1} parent=5 // pred_region
        %s294 = ssub.s32 %s18, 1
        %p295 = scmp.lt.s32.totalorder %s23, 1
        %s296 = scalar_select %p295, %s23, 1
        %s297 = smul.addr %s296, 8
        %s298 = scalar_lea.vmem %s0, %s297
        %p299 = pneg %p44
        %p300 = pneg %p41
        %p301 = pneg %p65
        %p302 = pneg %p62
        %p303 = pneg %p86
        %p304 = pneg %p83
        %p305 = pneg %p107
        %p306 = pneg %p104
        %p307 = pneg %p128
        %p308 = pneg %p125
        %p309 = pneg %p149
        %p310 = pneg %p146
        %p311 = pneg %p170
        %p312 = pneg %p167
        %p313 = pneg %p191
        %p314 = pneg %p188
        %p315 = pneg %p212
        %p316 = pneg %p209
        %p317 = pneg %p238
        %p318 = pneg %p235
        %s319 = sand.u32 %s225, 1
        %s320 = scalar_lea.sflag [#allocation3], %s319
        %s321 = sand.u32 %s225, 1
        %s322 = smul.addr %s321, 8
        %s323 = scalar_lea.vmem [#allocation2], %s322
        %p324 = scmp.lt.s32.totalorder %s23, 1
        %s325 = scalar_select %p324, %s23, 1
        %s326 = smul.addr %s325, 8
        %s327 = scalar_lea.vmem %s0, %s326
        %v328 = vld [vmem:[%s327] sm:$0xff]
        %v329 = vld [vmem:[%s1] sm:$0x1]
        %v330 = vld [vmem:[%s2] sm:$0x1]
        %vm331 = vcmask 261120
        %v332 = vsel %vm331, %v328, 0.0
        %333 = vadd.xlane.f32.xlu0 %v332
        %v334 = vpop.xlane.xlu0 %333
        %v335 = vmul.f32 %v328, %v328
        %v336 = vsel %vm331, %v335, 0.0
        %337 = vadd.xlane.f32.xlu0 %v336
        %v338 = vpop.xlane.xlu0 %337
        %v339 = vmul.f32 %v334, 0.03125
        %v340 = vmul.f32 %v338, 0.03125
        %v341 = vmul.f32 %v339, %v339
        %v342 = vsub.f32 %v340, %v341
        %v343 = vmax.f32 %v342, 0.0
        %v344 = vsub.f32 %v328, %v339
        %v345 = vadd.f32 %v343, 1e-05
        %v346 = vrsqrt.pop %v345
        %v347 = vmul.f32 %v346, %v345
        %v348 = vmul.f32 %v347, %v346
        %v349 = vmul.f32 0.5, %v348
        %v350 = vsub.f32 1.5, %v349
        %v351 = vmul.f32 %v346, %v350
        %vm352 = vweird.f32 %v345
        %vm353 = vweird.f32 %v346
        %vm354 = vmor %vm352, %vm353
        %v355 = vsel %vm354, %v346, %v351
        %v356 = vmul.f32 %v344, %v355
        %v358 = vperm.slane %v329, 0
        %v360 = vmul.f32 %v356, %v358
        %v362 = vperm.slane %v330, 0
        %v364 = vadd.f32 %v360, %v362
        %v365 = vld [vmem:[%s3] sm:$0xff]
        %v366 = vld [vmem:[%s3 + $0x8] sm:$0xff]
        %v367 = vld [vmem:[%s3 + $0x10] sm:$0xff]
        %v368 = vld [vmem:[%s3 + $0x18] sm:$0xff]
        %v369 = vld [vmem:[%s4] sm:$0x1]
        %v371 = vperm.slane %v369, 0
        %v374 = vsel %vm331, %v364, 0
        %376 = vmatpush.msra.mxu0 0.0
        %377 = vmatpush.msra.mxu0 0.0
        %378 = vmatpush.msra.mxu0 0.0
        %379 = vmatpush.msra.mxu0 0.0
        %380 = vmatpush.msra.mxu0 0.0
        %381 = vmatpush.msra.mxu0 0.0
        %382 = vmatpush.msra.mxu0 0.0
        %383 = vmatpush.msra.mxu0 0.0
        %384 = vmatpush.msra.mxu0 0.0
        %385 = vmatpush.msra.mxu0 0.0
        %386 = vmatpush.msra.mxu0 0.0
        %387 = vmatpush.msra.mxu0 0.0
        %388 = vmatpush.msra.mxu0 %v368
        %389 = vmatpush.msra.mxu0 %v367
        %390 = vmatpush.msra.mxu0 %v366
        %391 = vmatpush.msra.mxu0 %v365
        %392 = vmatmul.f32.gmra.mxu0 %v374
        %v393 = vpop.f32.mrf.mxu0
        %v394 = vadd.f32 %v371, %v393
        %395 = vdwg.mxu0
        %v396 = vld [vmem:[%s5] sm:$0x1]
        %v397 = vld [vmem:[%s6] sm:$0x1]
        %vm398 = vcmask 130048
        %v399 = vsel %vm398, %v394, 0.0
        %400 = vadd.xlane.f32.xlu0 %v399
        %v401 = vpop.xlane.xlu0 %400
        %v402 = vmul.f32 %v394, %v394
        %v403 = vsel %vm398, %v402, 0.0
        %404 = vadd.xlane.f32.xlu0 %v403
        %v405 = vpop.xlane.xlu0 %404
        %v406 = vmul.f32 %v401, 0.0625
        %v407 = vmul.f32 %v405, 0.0625
        %v408 = vmul.f32 %v406, %v406
        %v409 = vsub.f32 %v407, %v408
        %v410 = vmax.f32 %v409, 0.0
        %v411 = vsub.f32 %v394, %v406
        %v412 = vadd.f32 %v410, 1e-05
        %v413 = vrsqrt.pop %v412
        %v414 = vmul.f32 %v413, %v412
        %v415 = vmul.f32 %v414, %v413
        %v416 = vmul.f32 0.5, %v415
        %v417 = vsub.f32 1.5, %v416
        %v418 = vmul.f32 %v413, %v417
        %vm419 = vweird.f32 %v412
        %vm420 = vweird.f32 %v413
        %vm421 = vmor %vm419, %vm420
        %v422 = vsel %vm421, %v413, %v418
        %v423 = vmul.f32 %v411, %v422
        %v425 = vperm.slane %v396, 0
        %v427 = vmul.f32 %v423, %v425
        %v429 = vperm.slane %v397, 0
        %v431 = vadd.f32 %v427, %v429
        %v432 = vld [vmem:[%s7] sm:$0xff]
        %v433 = vld [vmem:[%s7 + $0x8] sm:$0xff]
        %v434 = vld [vmem:[%s8] sm:$0x1]
        %v436 = vperm.slane %v434, 0
        %v439 = vsel %vm398, %v431, 0
        %441 = vmatpush.msra.mxu0 0.0
        %442 = vmatpush.msra.mxu0 0.0
        %443 = vmatpush.msra.mxu0 0.0
        %444 = vmatpush.msra.mxu0 0.0
        %445 = vmatpush.msra.mxu0 0.0
        %446 = vmatpush.msra.mxu0 0.0
        %447 = vmatpush.msra.mxu0 0.0
        %448 = vmatpush.msra.mxu0 0.0
        %449 = vmatpush.msra.mxu0 0.0
        %450 = vmatpush.msra.mxu0 0.0
        %451 = vmatpush.msra.mxu0 0.0
        %452 = vmatpush.msra.mxu0 0.0
        %453 = vmatpush.msra.mxu0 0.0
        %454 = vmatpush.msra.mxu0 0.0
        %455 = vmatpush.msra.mxu0 %v433
        %456 = vmatpush.msra.mxu0 %v432
        %457 = vmatmul.f32.gmra.mxu0 %v439
        %v458 = vpop.f32.mrf.mxu0
        %v459 = vadd.f32 %v436, %v458
        %460 = vdwg.mxu0
        %v461 = vand.u32 2147483647, %v459
        %vm462 = vcmp.le.f32.partialorder %v461, 0.7853982
        %vm463 = vcmp.lt.s32.totalorder %v459, 0
        %v464 = vand.u32 %v459, 2139095040
        %v465 = vshrl.u32 %v464, 23
        %v466 = vsub.s32 %v465, 127
        %v467 = vand.u32 2147483647, %v459
        %v468 = vand.u32 %v467, 8388607
        %v469 = vor.u32 %v468, 8388608
        %v470 = vsub.s32 0, %v469
        %v471 = vadd.s32 %v466, 1
        %vm472 = vcmp.gt.s32.totalorder %v471, 0
        %v473 = vsel %vm472, %v471, 0
        %v474 = vshrl.u32 %v473, 5
        %v475 = vand.u32 %v473, 31
        %v476 = vsub.s32 32, %v475
        %v477 = vshrl.u32 683565275, %v476
        %v478 = vshll.u32 683565275, %v475
        %v479 = vshrl.u32 2475754826, %v476
        %v480 = vor.u32 %v478, %v479
        %v481 = vshll.u32 2475754826, %v475
        %v482 = vshrl.u32 2131351028, %v476
        %v483 = vor.u32 %v481, %v482
        %v484 = vshll.u32 2131351028, %v475
        %v485 = vshrl.u32 2102212464, %v476
        %v486 = vor.u32 %v484, %v485
        %v487 = vshll.u32 2102212464, %v475
        %v488 = vshrl.u32 920167782, %v476
        %v489 = vor.u32 %v487, %v488
        %v490 = vshll.u32 920167782, %v475
        %v491 = vshrl.u32 1326507024, %v476
        %v492 = vor.u32 %v490, %v491
        %vm493 = vcmp.lt.s32.totalorder %v474, 1
        %vm494 = vcmp.lt.s32.totalorder %v474, 2
        %vm495 = vcmp.lt.s32.totalorder %v474, 3
        %vm496 = vcmp.lt.s32.totalorder %v474, 4
        %v497 = vsel %vm493, %v477, %v480
        %v498 = vsel %vm496, %v486, 2102212464
        %v499 = vsel %vm495, %v483, %v498
        %v500 = vsel %vm494, %v497, %v499
        %v501 = vsel %vm493, %v480, %v483
        %v502 = vsel %vm496, %v489, 920167782
        %v503 = vsel %vm495, %v486, %v502
        %v504 = vsel %vm494, %v501, %v503
        %v505 = vsel %vm493, %v483, %v486
        %v506 = vsel %vm496, %v492, 1326507024
        %v507 = vsel %vm495, %v489, %v506
        %v508 = vsel %vm494, %v505, %v507
        %v509 = vshll.u32 %v469, 8
        %v510 = vand.u32 %v509, 65535
        %v511 = vshrl.u32 %v509, 16
        %v512 = vand.u32 %v508, 65535
        %v513 = vshrl.u32 %v508, 16
        %v514 = vmul.u32 %v510, %v512
        %v515 = vmul.u32 %v510, %v513
        %v516 = vmul.u32 %v511, %v512
        %v517 = vmul.u32 %v511, %v513
        %v518 = vshll.u32 %v515, 16
        %v519 = vshrl.u32 %v515, 16
        %v520 = vshll.u32 %v516, 16
        %v521 = vshrl.u32 %v516, 16
        %vm522 = vc.u32 %v514, %v518
        %v523 = vsel %vm522, 1, 0
        %v524 = vadd.s32 %v514, %v518
        %v525 = vadd.s32 %v517, %v523
        %vm526 = vc.u32 %v524, %v520
        %v527 = vsel %vm526, 1, 0
        %v528 = vadd.s32 %v524, %v520
        %v529 = vadd.s32 %v525, %v527
        %v530 = vadd.s32 %v529, %v519
        %v531 = vadd.s32 %v530, %v521
        %v532 = vand.u32 %v509, 65535
        %v533 = vshrl.u32 %v509, 16
        %v534 = vand.u32 %v504, 65535
        %v535 = vshrl.u32 %v504, 16
        %v536 = vmul.u32 %v532, %v534
        %v537 = vmul.u32 %v532, %v535
        %v538 = vmul.u32 %v533, %v534
        %v539 = vmul.u32 %v533, %v535
        %v540 = vshll.u32 %v537, 16
        %v541 = vshrl.u32 %v537, 16
        %v542 = vshll.u32 %v538, 16
        %v543 = vshrl.u32 %v538, 16
        %vm544 = vc.u32 %v536, %v540
        %v545 = vsel %vm544, 1, 0
        %v546 = vadd.s32 %v536, %v540
        %v547 = vadd.s32 %v539, %v545
        %vm548 = vc.u32 %v546, %v542
        %v549 = vsel %vm548, 1, 0
        %v550 = vadd.s32 %v546, %v542
        %v551 = vadd.s32 %v547, %v549
        %v552 = vadd.s32 %v551, %v541
        %v553 = vadd.s32 %v552, %v543
        %v554 = vmul.u32 %v509, %v500
        %v555 = vadd.s32 %v531, %v550
        %vm556 = vc.u32 %v531, %v550
        %v557 = vadd.s32 %v553, 1
        %v558 = vsel %vm556, %v557, %v553
        %v559 = vadd.s32 %v554, %v558
        %v560 = vadd.s32 %v559, 536870912
        %v561 = vshrl.u32 %v560, 30
        %v562 = vshll.u32 %v561, 30
        %v563 = vsub.s32 %v559, %v562
        %vm564 = vcmp.lt.s32.totalorder %v563, 0
        %v565 = vsub.s32 0, %v563
        %v566 = vsel %vm564, %v565, %v563
        %v567 = vclz %v566
        %v568 = vsub.s32 %v567, 2
        %vm569 = vcmp.gt.s32.totalorder 0, %v568
        %v570 = vsel %vm569, 0, %v568
        %v571 = vsub.s32 32, %v570
        %v572 = vshll.u32 %v563, %v570
        %v573 = vshrl.u32 %v555, %v571
        %v574 = vor.u32 %v572, %v573
        %v575 = vsub.s32 4294967266, %v570
        %v576 = vadd.s32 %v575, 127
        %v577 = vshll.u32 %v576, 23
        %v578 = vor.u32 4788187, %v577
        %v579 = vand.u32 2147483647, %v578
        %v581 = vcvt.s32.f32 %v574
        %v582 = vmul.f32 %v581, %v579
        %v583 = vxor.u32 %v582, 2147483648
        %v584 = vsel %vm463, %v583, %v582
        %v585 = vsub.s32 4, %v561
        %v586 = vsel %vm463, %v585, %v561
        %v587 = vsel %vm462, %v459, %v584
        %v588 = vsel %vm462, 0, %v586
        %v589 = vmul.f32 %v587, %v587
        %v590 = vmul.f32 %v589, -0.001358992
        %v591 = vadd.f32 %v590, 0.041655596
        %v592 = vmul.f32 %v589, %v591
        %v593 = vadd.f32 %v592, -0.4999988
        %v594 = vmul.f32 %v589, %v593
        %v595 = vadd.f32 1.0, %v594
        %v596 = vmul.f32 %v587, %v587
        %v597 = vmul.f32 %v596, -0.00019511016
        %v598 = vadd.f32 %v597, 0.008332121
        %v599 = vmul.f32 %v596, %v598
        %v600 = vadd.f32 %v599, -0.16666654
        %v601 = vmul.f32 %v596, %v600
        %v602 = vadd.f32 %v601, 1.0
        %v603 = vmul.f32 %v602, %v587
        %vm604 = vweird.f32 %v459
        %v605 = vadd.s32 %v588, 3
        %v606 = vand.u32 %v605, 3
        %vm607 = vcmp.lt.s32.totalorder %v606, 2
        %vm608 = vcmp.eq.s32.totalorder %v606, 0
        %v609 = vxor.u32 %v603, 2147483648
        %v610 = vsel %vm608, %v595, %v609
        %vm611 = vcmp.eq.s32.totalorder %v606, 2
        %v612 = vxor.u32 %v595, 2147483648
        %v613 = vsel %vm611, %v612, %v603
        %v614 = vsel %vm607, %v610, %v613
        %v615 = vsel %vm604, nan, %v614
        %v616 = vadd.f32 %v364, %v615
        %617 = vst.msk [vmem:[%s323] sm:$0xff] %vm331, %v616
        %s618 = sand.u32 %s225, 1
        %s619 = scalar_lea.sflag [#allocation3], %s618
        %s620 = sand.u32 %s225, 1
        %s621 = smul.addr %s620, 8
        %s622 = scalar_lea.vmem [#allocation2], %s621
        // Predicated region
        $region57: #{tpu_custom_call.1} parent=55 // pred_check
          %p623 = pneg %p235
        $region58: #{tpu_custom_call.1} parent=55 // pred_check_branch
          %625 = sbr.rel (%p623) target = $region60
        $region59: #{tpu_custom_call.1} parent=55 // pred_region
          %627 = vsyncadd %s619, 0
          %s628 = smul.addr %s23, 8
          %s629 = scalar_lea.hbm %s9, %s628
          %s631 = sshll.u32 %s622, 4
          %s632 = int_to_ptr.vmem [resolvable:$true] %s631
          %s633 = sshll.u32 %s629, 4
          %s634 = int_to_ptr.hbm [resolvable:$true] %s633
          %636 = dma.vmem_to_hbm [thread:$0]  %s632, 128, %s634, %s619
        $region60: #{tpu_custom_call.1} parent=55 // pred_fallthru
          _
      $region56: #{tpu_custom_call.1} parent=5 // pred_fallthru
        _
      %p637 = scmp.le.s32.totalorder 2, %s18
      // Predicated region
      $region61: #{tpu_custom_call.1} parent=5 // pred_check
        %p638 = pneg %p637
      $region62: #{tpu_custom_call.1} parent=5 // pred_check_branch
        %640 = sbr.rel (%p638) target = $region64
      $region63: #{tpu_custom_call.1} parent=5 // pred_region
        %s641 = ssub.s32 %s18, 2
        // Predicated region
        $region65: #{tpu_custom_call.1} parent=63 // pred_check
          %p642 = pneg %p241
        $region66: #{tpu_custom_call.1} parent=63 // pred_check_branch
          %644 = sbr.rel (%p642) target = $region68
        $region67: #{tpu_custom_call.1} parent=63 // pred_region
          %s645 = sand.u32 %s226, 1
          %s646 = scalar_lea.sflag [#allocation3], %s645
          %s647 = sand.u32 %s226, 1
          %s648 = smul.addr %s647, 8
          %s649 = scalar_lea.vmem [#allocation2], %s648
          %651 = dma.done %s646, 128
        $region68: #{tpu_custom_call.1} parent=63 // pred_fallthru
          _
      $region64: #{tpu_custom_call.1} parent=5 // pred_fallthru
        _
    $region6: #{tpu_custom_call.1} parent=1 // loop_footer
      %s22 = sadd.s32 1, %s18
    $region7: #{tpu_custom_call.1} parent=1 // loop_footer_branch
      %17 = sbr.rel target = $region3
    $region8: #{tpu_custom_call.1} parent=1 // loop_exit
      _
    %652 = vsyncpa [#allocation3], 1
    %s653 = scalar_lea.sflag [#allocation3], 1
    %654 = vsyncpa %s653, 1

</llo_original>
